<compile_context>
chip_gen: v7x
topology: tpu7x:2x2x1
jax: 0.10.0
libtpu: 0.0.40
codegen_flags: <defaults>
</compile_context>

<pallas_src>
import jax
import jax.numpy as jnp
from jax import lax
from jax.experimental import pallas as pl
from jax.experimental.pallas import tpu as pltpu

LANE = 128
NEG_BIG = -1e30  # finite pad bias; -inf would risk inf/NaN through the softmax

# Cast matmul operands to bf16 (f32 accumulation) for ~2x MXU throughput at
# large N.  Off here: at these tiny shapes the kernel is overhead-bound and the
# exact-parity check below assumes f32 operands.
USE_BF16_MATMUL = False


def _mm(a, b):
    if USE_BF16_MATMUL:
        a = a.astype(jnp.bfloat16)
        b = b.astype(jnp.bfloat16)
    return jnp.dot(a, b, preferred_element_type=jnp.float32)


def gcn_net_kernel(a_ref, x_ref, w1_ref, b1_ref, w2_ref, b2_ref, out_ref):
    # Batch dim of a_ref / x_ref / out_ref is squeezed out by the BlockSpecs.
    a = a_ref[...]                                       # (N, N)

    # Precondition: A is binary, symmetric, with no self-loops, so the self-loop
    # adds exactly 1 and deg >= 1 (no guard needed for rsqrt / reciprocal).
    deg = jnp.sum(a, axis=1, keepdims=True) + 1.0        # (N, 1)
    dis = lax.rsqrt(deg)                                 # D^-1/2   (EUP)
    dis2 = pl.reciprocal(deg, approx=True)               # D^-1     (EUP slot)

    # D^-1/2 (A + I) D^-1/2 @ H  ==  dis * (A @ (dis * H)) + dis2 * H
    # (scale the narrow (N, h) feature matrix, never the (N, N) adjacency).
    def propagate(h):
        return dis * _mm(a, dis * h) + dis2 * h

    # ----- layer 1: GCNConv(num_features -> hidden) + ReLU -------------------
    h = _mm(x_ref[...], w1_ref[...])
    h = propagate(h) + b1_ref[...]
    h = jnp.maximum(h, 0.0)

    # F.dropout(x, training=self.training): identity at inference.
    # TODO(synk): training-mode dropout (p=0.5) via pltpu.prng_random_bits.

    # ----- layer 2: GCNConv(hidden -> num_classes), lane-padded to 128 -------
    # w2/b2 arrive padded from the wrapper (zero weight cols, -1e30 pad bias)
    # so z is a full 128-lane slab and the output store is an unmasked vst.
    z = _mm(h, w2_ref[...])
    z = propagate(z) + b2_ref[...]

    # ----- log_softmax over class dim (pad lanes at -1e30 -> exp underflows) --
    z_max = jnp.max(z, axis=1, keepdims=True)
    z_shift = z - z_max
    lse = jnp.log(jnp.sum(jnp.exp(z_shift), axis=1, keepdims=True))
    out_ref[...] = z_shift - lse


def gcn_net_forward(adj, x, w1, b1, w2, b2):
    """adj: (B,N,N) or (N,N) binary symmetric (no self-loops); x: (B,N,F) or (N,F)."""
    single = adj.ndim == 2
    if single:
        adj, x = adj[None], x[None]
    bsz, n, _ = adj.shape
    f = x.shape[-1]
    hdim, c = w2.shape
    c_pad = max(LANE, ((c + LANE - 1) // LANE) * LANE)

    # Lane-pad the layer-2 params: zero weight columns keep padded logits at 0,
    # the -1e30 bias pushes them out of the softmax.
    w2_p = jnp.zeros((hdim, c_pad), jnp.float32).at[:, :c].set(w2)
    b2_p = jnp.full((1, c_pad), NEG_BIG, jnp.float32).at[:, :c].set(b2)

    # Per-graph tensors: one graph per grid step, batch dim squeezed in-kernel.
    batched = lambda shape: pl.BlockSpec((pl.Squeezed(),) + shape,
                                         lambda b: (b, 0, 0))
    # Shared params: constant block -> DMA'd once, VMEM-resident across steps.
    shared = lambda shape: pl.BlockSpec(shape, lambda b: (0,) * len(shape))

    out = pl.pallas_call(
        gcn_net_kernel,
        out_shape=jax.ShapeDtypeStruct((bsz, n, c_pad), jnp.float32),
        grid=(bsz,),
        in_specs=[
            batched((n, n)),
            batched((n, f)),
            shared(w1.shape),
            shared(b1.shape),
            shared(w2_p.shape),
            shared(b2_p.shape),
        ],
        out_specs=batched((n, c_pad)),
        compiler_params=pltpu.CompilerParams(
            # Graphs are independent: shard the batch axis across TensorCores
            # on v7x (2 TC/chip); no-op on v5e/v6e.
            dimension_semantics=("parallel",)),
        # Per-graph working set is ~60 KiB double-buffered: default scoped VMEM
        # is plenty, no explicit vmem_limit_bytes needed.
    )(adj, x, w1, b1, w2_p, b2_p)

    out = out[..., :c]
    return out[0] if single else out


def _reference(adj, x, w1, b1, w2, b2):
    n = adj.shape[0]
    a_tilde = adj + jnp.eye(n, dtype=adj.dtype)
    deg = a_tilde.sum(axis=1)
    dis = 1.0 / jnp.sqrt(deg)
    a_hat = dis[:, None] * a_tilde * dis[None, :]
    h = jnp.maximum(a_hat @ (x @ w1) + b1, 0.0)
    z = a_hat @ (h @ w2) + b2
    return jax.nn.log_softmax(z, axis=1)


if __name__ == "__main__":
    key = jax.random.PRNGKey(0)
    k_adj, k_x, k_w1, k_w2 = jax.random.split(key, 4)

    B = 4              # graphs batched along the parallel grid axis
    N = 64             # number of graph nodes
    NUM_FEATURES = 32  # dataset.num_features
    HIDDEN = 16        # args.dataset != 'F'  => hidden = 16
    NUM_CLASSES = 8    # dataset.num_classes

    # Symmetric 0/1 adjacencies, no self-loops (edge_attr = ones).
    def make_adj(k):
        upper = (jax.random.uniform(k, (N, N)) < 0.1).astype(jnp.float32)
        a = jnp.triu(upper, 1)
        return a + a.T

    adj = jnp.stack([make_adj(k) for k in jax.random.split(k_adj, B)])
    x = jax.random.normal(k_x, (B, N, NUM_FEATURES), dtype=jnp.float32)

    # GCNConv params: glorot-style weights, zero biases (deterministic).
    def glorot(k, shape):
        lim = jnp.sqrt(6.0 / (shape[0] + shape[1]))
        return jax.random.uniform(k, shape, jnp.float32, -lim, lim)

    w1 = glorot(k_w1, (NUM_FEATURES, HIDDEN))
    b1 = jnp.zeros((1, HIDDEN), jnp.float32)
    w2 = glorot(k_w2, (HIDDEN, NUM_CLASSES))
    b2 = jnp.zeros((1, NUM_CLASSES), jnp.float32)

    out = gcn_net_forward(adj, x, w1, b1, w2, b2)
    out = jax.block_until_ready(out)

    ref = jax.vmap(lambda a, xx: _reference(a, xx, w1, b1[0], w2, b2[0]))(adj, x)
    assert out.shape == (B, N, NUM_CLASSES)
    # 2e-3 tolerance absorbs the EUP approx reciprocal used for D^-1.
    assert jnp.allclose(out, ref, atol=2e-3, rtol=2e-3)

    print("KERNEL_OK")
</pallas_src>

<mosaic_0001>
module attributes {stable_mosaic.version = 11 : i64} {
  func.func @gcn_net_kernel(%arg0: i32, %arg1: memref<1x64x64xf32, #tpu.memory_space<vmem>>, %arg2: memref<1x64x32xf32, #tpu.memory_space<vmem>>, %arg3: memref<32x16xf32, #tpu.memory_space<vmem>>, %arg4: memref<1x16xf32, #tpu.memory_space<vmem>>, %arg5: memref<16x128xf32, #tpu.memory_space<vmem>>, %arg6: memref<1x128xf32, #tpu.memory_space<vmem>>, %arg7: memref<1x64x128xf32, #tpu.memory_space<vmem>>) attributes {dimension_semantics = [#tpu.dimension_semantics<parallel>], iteration_bounds = array<i64: 4>, scalar_prefetch = 0 : i64, scratch_operands = 0 : i64, tpu.core_type = #tpu.core_type<tc>, window_params = [{transform_indices = @transform_0, window_bounds = array<i64: 1, 64, 64>}, {transform_indices = @transform_1, window_bounds = array<i64: 1, 64, 32>}, {pipeline_mode = #tpu.pipeline_mode<synchronous>, transform_indices = @transform_2, window_bounds = array<i64: 32, 16>}, {pipeline_mode = #tpu.pipeline_mode<synchronous>, transform_indices = @transform_3, window_bounds = array<i64: 1, 16>}, {pipeline_mode = #tpu.pipeline_mode<synchronous>, transform_indices = @transform_4, window_bounds = array<i64: 16, 128>}, {pipeline_mode = #tpu.pipeline_mode<synchronous>, transform_indices = @transform_5, window_bounds = array<i64: 1, 128>}, {transform_indices = @transform_6, window_bounds = array<i64: 1, 64, 128>}]} {
    %c0 = arith.constant 0 : index
    %c0_0 = arith.constant 0 : index
    %c0_1 = arith.constant 0 : index
    %0 = vector.load %arg1[%c0, %c0_0, %c0_1] : memref<1x64x64xf32, #tpu.memory_space<vmem>>, vector<1x64x64xf32>
    %1 = vector.shape_cast %0 : vector<1x64x64xf32> to vector<64x64xf32>
    %cst = arith.constant dense<0.000000e+00> : vector<64xf32>
    %2 = vector.multi_reduction <add>, %1, %cst [1] : vector<64x64xf32> to vector<64xf32>
    %3 = vector.shape_cast %2 : vector<64xf32> to vector<64x1xf32>
    %cst_2 = arith.constant 1.000000e+00 : f32
    %4 = vector.broadcast %cst_2 : f32 to vector<64x1xf32>
    %5 = arith.addf %3, %4 : vector<64x1xf32>
    %6 = math.rsqrt %5 : vector<64x1xf32>
    %7 = tpu.reciprocal %5 {approx = true} : vector<64x1xf32> -> vector<64x1xf32>
    %c0_3 = arith.constant 0 : index
    %c0_4 = arith.constant 0 : index
    %c0_5 = arith.constant 0 : index
    %8 = vector.load %arg2[%c0_3, %c0_4, %c0_5] : memref<1x64x32xf32, #tpu.memory_space<vmem>>, vector<1x64x32xf32>
    %9 = vector.shape_cast %8 : vector<1x64x32xf32> to vector<64x32xf32>
    %c0_6 = arith.constant 0 : index
    %c0_7 = arith.constant 0 : index
    %10 = vector.load %arg3[%c0_6, %c0_7] : memref<32x16xf32, #tpu.memory_space<vmem>>, vector<32x16xf32>
    %cst_8 = arith.constant dense<0.000000e+00> : vector<64x16xf32>
    %11 = tpu.matmul %9, %10, %cst_8 {dimension_numbers = #tpu.dot_dimension_numbers<[1], [0], [0], [1], [0, 0, 1, 1], [], []>} : vector<64x32xf32>, vector<32x16xf32>, vector<64x16xf32> -> vector<64x16xf32>
    %12 = vector.broadcast %6 : vector<64x1xf32> to vector<64x16xf32>
    %13 = arith.mulf %12, %11 : vector<64x16xf32>
    %cst_9 = arith.constant dense<0.000000e+00> : vector<64x16xf32>
    %14 = tpu.matmul %1, %13, %cst_9 {dimension_numbers = #tpu.dot_dimension_numbers<[1], [0], [0], [1], [0, 0, 1, 1], [], []>} : vector<64x64xf32>, vector<64x16xf32>, vector<64x16xf32> -> vector<64x16xf32>
    %15 = vector.broadcast %6 : vector<64x1xf32> to vector<64x16xf32>
    %16 = arith.mulf %15, %14 : vector<64x16xf32>
    %17 = vector.broadcast %7 : vector<64x1xf32> to vector<64x16xf32>
    %18 = arith.mulf %17, %11 : vector<64x16xf32>
    %19 = arith.addf %16, %18 : vector<64x16xf32>
    %c0_10 = arith.constant 0 : index
    %c0_11 = arith.constant 0 : index
    %20 = vector.load %arg4[%c0_10, %c0_11] : memref<1x16xf32, #tpu.memory_space<vmem>>, vector<1x16xf32>
    %21 = vector.broadcast %20 : vector<1x16xf32> to vector<64x16xf32>
    %22 = arith.addf %19, %21 : vector<64x16xf32>
    %cst_12 = arith.constant 0.000000e+00 : f32
    %23 = vector.broadcast %cst_12 : f32 to vector<64x16xf32>
    %24 = arith.maximumf %22, %23 : vector<64x16xf32>
    %c0_13 = arith.constant 0 : index
    %c0_14 = arith.constant 0 : index
    %25 = vector.load %arg5[%c0_13, %c0_14] : memref<16x128xf32, #tpu.memory_space<vmem>>, vector<16x128xf32>
    %cst_15 = arith.constant dense<0.000000e+00> : vector<64x128xf32>
    %26 = tpu.matmul %24, %25, %cst_15 {dimension_numbers = #tpu.dot_dimension_numbers<[1], [0], [0], [1], [0, 0, 1, 1], [], []>} : vector<64x16xf32>, vector<16x128xf32>, vector<64x128xf32> -> vector<64x128xf32>
    %27 = vector.broadcast %6 : vector<64x1xf32> to vector<64x128xf32>
    %28 = arith.mulf %27, %26 : vector<64x128xf32>
    %cst_16 = arith.constant dense<0.000000e+00> : vector<64x128xf32>
    %29 = tpu.matmul %1, %28, %cst_16 {dimension_numbers = #tpu.dot_dimension_numbers<[1], [0], [0], [1], [0, 0, 1, 1], [], []>} : vector<64x64xf32>, vector<64x128xf32>, vector<64x128xf32> -> vector<64x128xf32>
    %30 = vector.broadcast %6 : vector<64x1xf32> to vector<64x128xf32>
    %31 = arith.mulf %30, %29 : vector<64x128xf32>
    %32 = vector.broadcast %7 : vector<64x1xf32> to vector<64x128xf32>
    %33 = arith.mulf %32, %26 : vector<64x128xf32>
    %34 = arith.addf %31, %33 : vector<64x128xf32>
    %c0_17 = arith.constant 0 : index
    %c0_18 = arith.constant 0 : index
    %35 = vector.load %arg6[%c0_17, %c0_18] : memref<1x128xf32, #tpu.memory_space<vmem>>, vector<1x128xf32>
    %36 = vector.broadcast %35 : vector<1x128xf32> to vector<64x128xf32>
    %37 = arith.addf %34, %36 : vector<64x128xf32>
    %cst_19 = arith.constant dense<0xFF800000> : vector<64xf32>
    %38 = vector.multi_reduction <maximumf>, %37, %cst_19 [1] : vector<64x128xf32> to vector<64xf32>
    %39 = vector.shape_cast %38 : vector<64xf32> to vector<64x1xf32>
    %40 = vector.broadcast %39 : vector<64x1xf32> to vector<64x128xf32>
    %41 = arith.subf %37, %40 : vector<64x128xf32>
    %42 = math.exp %41 : vector<64x128xf32>
    %cst_20 = arith.constant dense<0.000000e+00> : vector<64xf32>
    %43 = vector.multi_reduction <add>, %42, %cst_20 [1] : vector<64x128xf32> to vector<64xf32>
    %44 = vector.shape_cast %43 : vector<64xf32> to vector<64x1xf32>
    %45 = math.log %44 : vector<64x1xf32>
    %46 = vector.broadcast %45 : vector<64x1xf32> to vector<64x128xf32>
    %47 = arith.subf %41, %46 : vector<64x128xf32>
    %c0_21 = arith.constant 0 : index
    %c0_22 = arith.constant 0 : index
    %c0_23 = arith.constant 0 : index
    %48 = vector.load %arg7[%c0_21, %c0_22, %c0_23] : memref<1x64x128xf32, #tpu.memory_space<vmem>>, vector<1x64x128xf32>
    %49 = vector.shape_cast %48 : vector<1x64x128xf32> to vector<64x128xf32>
    %50 = vector.shape_cast %47 : vector<64x128xf32> to vector<1x64x128xf32>
    tpu.vector_store %arg7[%c0_21, %c0_22, %c0_23], %50 {strides = array<i32>} : memref<1x64x128xf32, #tpu.memory_space<vmem>>, vector<1x64x128xf32>,
    return
  }
  func.func @transform_0(%arg0: i32) -> (i32, i32, i32) {
    %c0_i32 = arith.constant 0 : i32
    %c0_i32_0 = arith.constant 0 : i32
    %c0_i32_1 = arith.constant 0 : i32
    return %arg0, %c0_i32, %c0_i32_0 : i32, i32, i32
  }
  func.func @transform_1(%arg0: i32) -> (i32, i32, i32) {
    %c0_i32 = arith.constant 0 : i32
    %c0_i32_0 = arith.constant 0 : i32
    %c0_i32_1 = arith.constant 0 : i32
    return %arg0, %c0_i32, %c0_i32_0 : i32, i32, i32
  }
  func.func @transform_2(%arg0: i32) -> (i32, i32) {
    %c0_i32 = arith.constant 0 : i32
    %c0_i32_0 = arith.constant 0 : i32
    %c0_i32_1 = arith.constant 0 : i32
    return %c0_i32, %c0_i32_0 : i32, i32
  }
  func.func @transform_3(%arg0: i32) -> (i32, i32) {
    %c0_i32 = arith.constant 0 : i32
    %c0_i32_0 = arith.constant 0 : i32
    %c0_i32_1 = arith.constant 0 : i32
    return %c0_i32, %c0_i32_0 : i32, i32
  }
  func.func @transform_4(%arg0: i32) -> (i32, i32) {
    %c0_i32 = arith.constant 0 : i32
    %c0_i32_0 = arith.constant 0 : i32
    %c0_i32_1 = arith.constant 0 : i32
    return %c0_i32, %c0_i32_0 : i32, i32
  }
  func.func @transform_5(%arg0: i32) -> (i32, i32) {
    %c0_i32 = arith.constant 0 : i32
    %c0_i32_0 = arith.constant 0 : i32
    %c0_i32_1 = arith.constant 0 : i32
    return %c0_i32, %c0_i32_0 : i32, i32
  }
  func.func @transform_6(%arg0: i32) -> (i32, i32, i32) {
    %c0_i32 = arith.constant 0 : i32
    %c0_i32_0 = arith.constant 0 : i32
    %c0_i32_1 = arith.constant 0 : i32
    return %arg0, %c0_i32, %c0_i32_0 : i32, i32, i32
  }
}

</mosaic_0001>

<llo_original>
// kernel: tpu_custom_call.1
$region0: #{tpu_custom_call.1}
  #allocation0 [shape = 'u32[]', space=smem, size = 0x4, offset = 0x4, fixed_abs, tag = 'smem constant byte address 0x4 - core index']
  #allocation1 [shape = 'u32[144,128]{1,0:T(1,128)}', space=vmem, size = 0x12000, scoped, tag = 'internal scratch']
  %s0 = inlined_call_operand.vmem [shape: f32[4,64,64], index: 0, kind: input, shape index: {}]
  %s1 = inlined_call_operand.vmem [shape: f32[4,64,32], index: 1, kind: input, shape index: {}]
  %s2 = inlined_call_operand.vmem [shape: f32[32,16], index: 2, kind: input, shape index: {}]
  %s3 = inlined_call_operand.vmem [shape: f32[1,16], index: 3, kind: input, shape index: {}]
  %s4 = inlined_call_operand.vmem [shape: f32[16,128], index: 4, kind: input, shape index: {}]
  %s5 = inlined_call_operand.vmem [shape: f32[1,128], index: 5, kind: input, shape index: {}]
  %s6 = inlined_call_operand.hbm [shape: f32[4,64,128], index: 6, kind: output, shape index: {}]
  %s7 = sld [smem:[#allocation0]]
  $region57: #{tpu_custom_call.1} parent=0
    _
  %s9 = ssub.s32 1, %s7
  %s10 = scalar_select 0, %s9, %s7
  $region1: #{tpu_custom_call.1} parent=0
    #allocation2 [shape = 'u8[65536]{0}', space=vmem, size = 0x10000, scoped, tag = 'output window, operand 0']
    #allocation3 [shape = 's32[2]{0}', space=sflag, size = 0x8, scoped, tag = 'scoped memory for tpu_custom_call.1']
    %11 = vsyncpa [#allocation3], 0
    %s12 = scalar_lea.sflag [#allocation3], 1
    %13 = vsyncpa %s12, 0
    loop: start=0, step=1, limit=6
    $region2: #{tpu_custom_call.1} parent=1 // loop_pre_header
      _
    $region3: #{tpu_custom_call.1} parent=1 // loop_header
      %s15 = sphi 0, %s19
      %p16 = scmp.ge.s32.totalorder %s15, 6
      %s25 = sphi 0, %s27
      %s28 = sphi 0, %s25
      %s29 = sphi 0, %s28
      %s45 = sphi 0, %s29
      %s51 = sphi 0, %s53
      %s54 = sphi 0, %s51
      %s55 = sphi 0, %s54
      %s71 = sphi 0, %s55
      %s75 = sphi 0, %s75
      %s77 = sphi 0, %s75
      %s78 = sphi 0, %s77
      %s92 = sphi 0, %s78
      %s96 = sphi 0, %s96
      %s98 = sphi 0, %s96
      %s99 = sphi 0, %s98
      %s113 = sphi 0, %s99
      %s117 = sphi 0, %s117
      %s119 = sphi 0, %s117
      %s120 = sphi 0, %s119
      %s134 = sphi 0, %s120
      %s138 = sphi 0, %s138
      %s140 = sphi 0, %s138
      %s141 = sphi 0, %s140
      %s155 = sphi 0, %s141
      %s161 = sphi 0, %s163
      %s164 = sphi 0, %s161
      %s165 = sphi 0, %s164
      %s181 = sphi 0, %s165
    $region4: #{tpu_custom_call.1} parent=1 // loop_header_branch
      %18 = sbr.rel (%p16) target = $region8
    $region5: #{tpu_custom_call.1} parent=1 // loop_body
      %s20 = ssub.s32 %s15, 1
      %s21 = ssub.s32 %s15, 2
      %s22 = sadd.s32 %s15, 1
      %s23 = ssub.s32 %s15, %s22
      %p24 = scmp.eq.s32.totalorder %s23, 0
      %s26 = sadd.s32 %s25, 1
      %s27 = scalar_select %p24, %s25, %s26
      %p30 = pneg %p24
      %p31 = scmp.eq.s32.totalorder %s15, 3
      %p32 = por %p30, %p31
      %p33 = scmp.ne.s32.totalorder %s25, %s28
      %p34 = scmp.eq.s32.totalorder %s15, 0
      %p35 = por %p33, %p34
      %p36 = scmp.ne.s32.totalorder %s25, %s28
      %p37 = scmp.eq.s32.totalorder %s20, 3
      %p38 = por %p36, %p37
      %p39 = scmp.ne.s32.totalorder %s28, %s29
      %p40 = scmp.eq.s32.totalorder %s20, 0
      %p41 = por %p39, %p40
      %p42 = scmp.ne.s32.totalorder %s28, %s29
      %p43 = scmp.eq.s32.totalorder %s21, 3
      %p44 = por %p42, %p43
      %p46 = scmp.ne.s32.totalorder %s29, %s45
      %p47 = scmp.eq.s32.totalorder %s21, 0
      %p48 = por %p46, %p47
      %s49 = ssub.s32 %s15, %s22
      %p50 = scmp.eq.s32.totalorder %s49, 0
      %s52 = sadd.s32 %s51, 1
      %s53 = scalar_select %p50, %s51, %s52
      %p56 = pneg %p50
      %p57 = scmp.eq.s32.totalorder %s15, 3
      %p58 = por %p56, %p57
      %p59 = scmp.ne.s32.totalorder %s51, %s54
      %p60 = scmp.eq.s32.totalorder %s15, 0
      %p61 = por %p59, %p60
      %p62 = scmp.ne.s32.totalorder %s51, %s54
      %p63 = scmp.eq.s32.totalorder %s20, 3
      %p64 = por %p62, %p63
      %p65 = scmp.ne.s32.totalorder %s54, %s55
      %p66 = scmp.eq.s32.totalorder %s20, 0
      %p67 = por %p65, %p66
      %p68 = scmp.ne.s32.totalorder %s54, %s55
      %p69 = scmp.eq.s32.totalorder %s21, 3
      %p70 = por %p68, %p69
      %p72 = scmp.ne.s32.totalorder %s55, %s71
      %p73 = scmp.eq.s32.totalorder %s21, 0
      %p74 = por %p72, %p73
      %s76 = sadd.s32 %s75, 1
      %p79 = scmp.eq.s32.totalorder %s15, 3
      %p80 = scmp.ne.s32.totalorder %s75, %s77
      %p81 = scmp.eq.s32.totalorder %s15, 0
      %p82 = por %p80, %p81
      %p83 = scmp.ne.s32.totalorder %s75, %s77
      %p84 = scmp.eq.s32.totalorder %s20, 3
      %p85 = por %p83, %p84
      %p86 = scmp.ne.s32.totalorder %s77, %s78
      %p87 = scmp.eq.s32.totalorder %s20, 0
      %p88 = por %p86, %p87
      %p89 = scmp.ne.s32.totalorder %s77, %s78
      %p90 = scmp.eq.s32.totalorder %s21, 3
      %p91 = por %p89, %p90
      %p93 = scmp.ne.s32.totalorder %s78, %s92
      %p94 = scmp.eq.s32.totalorder %s21, 0
      %p95 = por %p93, %p94
      %s97 = sadd.s32 %s96, 1
      %p100 = scmp.eq.s32.totalorder %s15, 3
      %p101 = scmp.ne.s32.totalorder %s96, %s98
      %p102 = scmp.eq.s32.totalorder %s15, 0
      %p103 = por %p101, %p102
      %p104 = scmp.ne.s32.totalorder %s96, %s98
      %p105 = scmp.eq.s32.totalorder %s20, 3
      %p106 = por %p104, %p105
      %p107 = scmp.ne.s32.totalorder %s98, %s99
      %p108 = scmp.eq.s32.totalorder %s20, 0
      %p109 = por %p107, %p108
      %p110 = scmp.ne.s32.totalorder %s98, %s99
      %p111 = scmp.eq.s32.totalorder %s21, 3
      %p112 = por %p110, %p111
      %p114 = scmp.ne.s32.totalorder %s99, %s113
      %p115 = scmp.eq.s32.totalorder %s21, 0
      %p116 = por %p114, %p115
      %s118 = sadd.s32 %s117, 1
      %p121 = scmp.eq.s32.totalorder %s15, 3
      %p122 = scmp.ne.s32.totalorder %s117, %s119
      %p123 = scmp.eq.s32.totalorder %s15, 0
      %p124 = por %p122, %p123
      %p125 = scmp.ne.s32.totalorder %s117, %s119
      %p126 = scmp.eq.s32.totalorder %s20, 3
      %p127 = por %p125, %p126
      %p128 = scmp.ne.s32.totalorder %s119, %s120
      %p129 = scmp.eq.s32.totalorder %s20, 0
      %p130 = por %p128, %p129
      %p131 = scmp.ne.s32.totalorder %s119, %s120
      %p132 = scmp.eq.s32.totalorder %s21, 3
      %p133 = por %p131, %p132
      %p135 = scmp.ne.s32.totalorder %s120, %s134
      %p136 = scmp.eq.s32.totalorder %s21, 0
      %p137 = por %p135, %p136
      %s139 = sadd.s32 %s138, 1
      %p142 = scmp.eq.s32.totalorder %s15, 3
      %p143 = scmp.ne.s32.totalorder %s138, %s140
      %p144 = scmp.eq.s32.totalorder %s15, 0
      %p145 = por %p143, %p144
      %p146 = scmp.ne.s32.totalorder %s138, %s140
      %p147 = scmp.eq.s32.totalorder %s20, 3
      %p148 = por %p146, %p147
      %p149 = scmp.ne.s32.totalorder %s140, %s141
      %p150 = scmp.eq.s32.totalorder %s20, 0
      %p151 = por %p149, %p150
      %p152 = scmp.ne.s32.totalorder %s140, %s141
      %p153 = scmp.eq.s32.totalorder %s21, 3
      %p154 = por %p152, %p153
      %p156 = scmp.ne.s32.totalorder %s141, %s155
      %p157 = scmp.eq.s32.totalorder %s21, 0
      %p158 = por %p156, %p157
      %s159 = ssub.s32 %s15, %s22
      %p160 = scmp.eq.s32.totalorder %s159, 0
      %s162 = sadd.s32 %s161, 1
      %s163 = scalar_select %p160, %s161, %s162
      %p166 = pneg %p160
      %p167 = scmp.eq.s32.totalorder %s15, 3
      %p168 = por %p166, %p167
      %p169 = scmp.ne.s32.totalorder %s161, %s164
      %p170 = scmp.eq.s32.totalorder %s15, 0
      %p171 = por %p169, %p170
      %p172 = scmp.ne.s32.totalorder %s161, %s164
      %p173 = scmp.eq.s32.totalorder %s20, 3
      %p174 = por %p172, %p173
      %p175 = scmp.ne.s32.totalorder %s164, %s165
      %p176 = scmp.eq.s32.totalorder %s20, 0
      %p177 = por %p175, %p176
      %p178 = scmp.ne.s32.totalorder %s164, %s165
      %p179 = scmp.eq.s32.totalorder %s21, 3
      %p180 = por %p178, %p179
      %p182 = scmp.ne.s32.totalorder %s165, %s181
      %p183 = scmp.eq.s32.totalorder %s21, 0
      %p184 = por %p182, %p183
      %p185 = scmp.le.s32.totalorder 1, %s15
      %p186 = scmp.lt.s32.totalorder %s15, 5
      %p187 = pnand %p185, %p186
      %p188 = pneg %p187
      // Predicated region
      $region9: #{tpu_custom_call.1} parent=5 // pred_check
        _
      $region10: #{tpu_custom_call.1} parent=5 // pred_check_branch
        %190 = sbr.rel (%p187) target = $region12
      $region11: #{tpu_custom_call.1} parent=5 // pred_region
        %s191 = ssub.s32 %s15, 1
        // Predicated region
        $region13: #{tpu_custom_call.1} parent=11 // pred_check
          %p192 = pneg %p88
        $region14: #{tpu_custom_call.1} parent=11 // pred_check_branch
          %194 = sbr.rel (%p192) target = $region16
        $region15: #{tpu_custom_call.1} parent=11 // pred_region
          _
        $region16: #{tpu_custom_call.1} parent=11 // pred_fallthru
          _
        // Predicated region
        $region17: #{tpu_custom_call.1} parent=11 // pred_check
          %p195 = pneg %p109
        $region18: #{tpu_custom_call.1} parent=11 // pred_check_branch
          %197 = sbr.rel (%p195) target = $region20
        $region19: #{tpu_custom_call.1} parent=11 // pred_region
          _
        $region20: #{tpu_custom_call.1} parent=11 // pred_fallthru
          _
        // Predicated region
        $region21: #{tpu_custom_call.1} parent=11 // pred_check
          %p198 = pneg %p130
        $region22: #{tpu_custom_call.1} parent=11 // pred_check_branch
          %200 = sbr.rel (%p198) target = $region24
        $region23: #{tpu_custom_call.1} parent=11 // pred_region
          _
        $region24: #{tpu_custom_call.1} parent=11 // pred_fallthru
          _
        // Predicated region
        $region25: #{tpu_custom_call.1} parent=11 // pred_check
          %p201 = pneg %p151
        $region26: #{tpu_custom_call.1} parent=11 // pred_check_branch
          %203 = sbr.rel (%p201) target = $region28
        $region27: #{tpu_custom_call.1} parent=11 // pred_region
          _
        $region28: #{tpu_custom_call.1} parent=11 // pred_fallthru
          _
      $region12: #{tpu_custom_call.1} parent=5 // pred_fallthru
        _
      %p204 = scmp.lt.s32.totalorder %s15, 4
      // Predicated region
      $region29: #{tpu_custom_call.1} parent=5 // pred_check
        %p205 = pneg %p204
      $region30: #{tpu_custom_call.1} parent=5 // pred_check_branch
        %207 = sbr.rel (%p205) target = $region32
      $region31: #{tpu_custom_call.1} parent=5 // pred_region
        // Predicated region
        $region33: #{tpu_custom_call.1} parent=31 // pred_check
          %p208 = pneg %p35
        $region34: #{tpu_custom_call.1} parent=31 // pred_check_branch
          %210 = sbr.rel (%p208) target = $region36
        $region35: #{tpu_custom_call.1} parent=31 // pred_region
          %p211 = scmp.lt.s32.totalorder %s15, 3
          %s212 = scalar_select %p211, %s15, 3
          %s213 = smul.addr %s212, 8
          %s214 = smul.addr %s213, 8
          %s215 = scalar_lea.vmem %s0, %s214
        $region36: #{tpu_custom_call.1} parent=31 // pred_fallthru
          _
        // Predicated region
        $region37: #{tpu_custom_call.1} parent=31 // pred_check
          %p216 = pneg %p61
        $region38: #{tpu_custom_call.1} parent=31 // pred_check_branch
          %218 = sbr.rel (%p216) target = $region40
        $region39: #{tpu_custom_call.1} parent=31 // pred_region
          %p219 = scmp.lt.s32.totalorder %s15, 3
          %s220 = scalar_select %p219, %s15, 3
          %s221 = smul.addr %s220, 8
          %s222 = smul.addr %s221, 8
          %s223 = scalar_lea.vmem %s1, %s222
        $region40: #{tpu_custom_call.1} parent=31 // pred_fallthru
          _
      $region32: #{tpu_custom_call.1} parent=5 // pred_fallthru
        _
      %p224 = scmp.le.s32.totalorder 1, %s15
      %p225 = scmp.lt.s32.totalorder %s15, 5
      %p226 = pnand %p224, %p225
      %p227 = pneg %p226
      // Predicated region
      $region41: #{tpu_custom_call.1} parent=5 // pred_check
        _
      $region42: #{tpu_custom_call.1} parent=5 // pred_check_branch
        %229 = sbr.rel (%p226) target = $region44
      $region43: #{tpu_custom_call.1} parent=5 // pred_region
        %s230 = ssub.s32 %s15, 1
        %p231 = scmp.lt.s32.totalorder %s20, 3
        %s232 = scalar_select %p231, %s20, 3
        %s233 = smul.addr %s232, 8
        %s234 = smul.addr %s233, 8
        %s235 = scalar_lea.vmem %s0, %s234
        %p236 = pneg %p41
        %p237 = pneg %p38
        %p238 = scmp.lt.s32.totalorder %s20, 3
        %s239 = scalar_select %p238, %s20, 3
        %s240 = smul.addr %s239, 8
        %s241 = smul.addr %s240, 8
        %s242 = scalar_lea.vmem %s1, %s241
        %p243 = pneg %p67
        %p244 = pneg %p64
        %p245 = pneg %p88
        %p246 = pneg %p85
        %p247 = pneg %p109
        %p248 = pneg %p106
        %p249 = pneg %p130
        %p250 = pneg %p127
        %p251 = pneg %p151
        %p252 = pneg %p148
        %p253 = pneg %p177
        %p254 = pneg %p174
        %s255 = sand.u32 %s164, 1
        %s256 = scalar_lea.sflag [#allocation3], %s255
        %s257 = sand.u32 %s164, 1
        %s258 = smul.addr %s257, 64
        %s259 = scalar_lea.vmem [#allocation2], %s258
        %p260 = scmp.lt.s32.totalorder %s20, 3
        %s261 = scalar_select %p260, %s20, 3
        %s262 = smul.addr %s261, 8
        %s263 = smul.addr %s262, 8
        %s264 = scalar_lea.vmem %s0, %s263
        %p265 = scmp.lt.s32.totalorder %s20, 3
        %s266 = scalar_select %p265, %s20, 3
        %s267 = smul.addr %s266, 8
        %s268 = smul.addr %s267, 8
        %s269 = scalar_lea.vmem %s1, %s268
        %v270 = vld [vmem:[%s264] sm:$0xff]
        %v271 = vld [vmem:[%s264 + $0x8] sm:$0xff]
        %v272 = vld [vmem:[%s264 + $0x10] sm:$0xff]
        %v273 = vld [vmem:[%s264 + $0x18] sm:$0xff]
        %v274 = vld [vmem:[%s264 + $0x20] sm:$0xff]
        %v275 = vld [vmem:[%s264 + $0x28] sm:$0xff]
        %v276 = vld [vmem:[%s264 + $0x30] sm:$0xff]
        %v277 = vld [vmem:[%s264 + $0x38] sm:$0xff]
        %vm278 = vcmask 523264
        %v279 = vsel %vm278, %v270, 0.0
        %280 = vadd.xlane.f32.xlu0 %v279
        %v281 = vpop.xlane.xlu0 %280
        %v282 = vsel %vm278, %v271, 0.0
        %283 = vadd.xlane.f32.xlu0 %v282
        %v284 = vpop.xlane.xlu0 %283
        %v285 = vsel %vm278, %v272, 0.0
        %286 = vadd.xlane.f32.xlu0 %v285
        %v287 = vpop.xlane.xlu0 %286
        %v288 = vsel %vm278, %v273, 0.0
        %289 = vadd.xlane.f32.xlu0 %v288
        %v290 = vpop.xlane.xlu0 %289
        %v291 = vsel %vm278, %v274, 0.0
        %292 = vadd.xlane.f32.xlu0 %v291
        %v293 = vpop.xlane.xlu0 %292
        %v294 = vsel %vm278, %v275, 0.0
        %295 = vadd.xlane.f32.xlu0 %v294
        %v296 = vpop.xlane.xlu0 %295
        %v297 = vsel %vm278, %v276, 0.0
        %298 = vadd.xlane.f32.xlu0 %v297
        %v299 = vpop.xlane.xlu0 %298
        %v300 = vsel %vm278, %v277, 0.0
        %301 = vadd.xlane.f32.xlu0 %v300
        %v302 = vpop.xlane.xlu0 %301
        %v303 = vadd.f32 %v281, 1.0
        %v304 = vadd.f32 %v284, 1.0
        %v305 = vadd.f32 %v287, 1.0
        %v306 = vadd.f32 %v290, 1.0
        %v307 = vadd.f32 %v293, 1.0
        %v308 = vadd.f32 %v296, 1.0
        %v309 = vadd.f32 %v299, 1.0
        %v310 = vadd.f32 %v302, 1.0
        %v311 = vrsqrt.pop %v303
        %v312 = vrsqrt.pop %v304
        %v313 = vrsqrt.pop %v305
        %v314 = vrsqrt.pop %v306
        %v315 = vrsqrt.pop %v307
        %v316 = vrsqrt.pop %v308
        %v317 = vrsqrt.pop %v309
        %v318 = vrsqrt.pop %v310
        %v319 = vrcp.pop %v303
        %v320 = vrcp.pop %v304
        %v321 = vrcp.pop %v305
        %v322 = vrcp.pop %v306
        %v323 = vrcp.pop %v307
        %v324 = vrcp.pop %v308
        %v325 = vrcp.pop %v309
        %v326 = vrcp.pop %v310
        %v327 = vld [vmem:[%s269] sm:$0xff]
        %v328 = vld [vmem:[%s269 + $0x8] sm:$0xff]
        %v329 = vld [vmem:[%s269 + $0x10] sm:$0xff]
        %v330 = vld [vmem:[%s269 + $0x18] sm:$0xff]
        %v331 = vld [vmem:[%s269 + $0x20] sm:$0xff]
        %v332 = vld [vmem:[%s269 + $0x28] sm:$0xff]
        %v333 = vld [vmem:[%s269 + $0x30] sm:$0xff]
        %v334 = vld [vmem:[%s269 + $0x38] sm:$0xff]
        %v335 = vld [vmem:[%s2] sm:$0xff]
        %v336 = vld [vmem:[%s2 + $0x8] sm:$0xff]
        %v337 = vld [vmem:[%s2 + $0x10] sm:$0xff]
        %v338 = vld [vmem:[%s2 + $0x18] sm:$0xff]
        %vm339 = vcmask 261120
        %v341 = vsel %vm339, %v327, 0
        %v344 = vsel %vm339, %v328, 0
        %v347 = vsel %vm339, %v329, 0
        %v350 = vsel %vm339, %v330, 0
        %v353 = vsel %vm339, %v331, 0
        %v356 = vsel %vm339, %v332, 0
        %v359 = vsel %vm339, %v333, 0
        %v362 = vsel %vm339, %v334, 0
        %364 = vmatprep.subr.mxu0 0.0
        %365 = vmatpush1.msra.mxu0 %v335
        %366 = vmatprep.subr.mxu0 0.0
        %367 = vmatpush1.msra.mxu0 %v336
        %368 = vmatprep.subr.mxu0 0.0
        %369 = vmatpush1.msra.mxu0 %v337
        %370 = vmatprep.subr.mxu0 0.0
        %371 = vmatpush1.msra.mxu0 %v338
        %372 = vmatprep.subr.mxu0 0.0
        %373 = vmatpush1.msra.mxu0 0.0
        %374 = vmatprep.subr.mxu0 0.0
        %375 = vmatpush1.msra.mxu0 0.0
        %376 = vmatprep.subr.mxu0 0.0
        %377 = vmatpush1.msra.mxu0 0.0
        %378 = vmatprep.subr.mxu0 0.0
        %379 = vmatpush1.msra.mxu0 0.0
        %380 = vmatprep.subr.mxu0 0.0
        %381 = vmatpush1.msra.mxu0 0.0
        %382 = vmatprep.subr.mxu0 0.0
        %383 = vmatpush1.msra.mxu0 0.0
        %384 = vmatprep.subr.mxu0 0.0
        %385 = vmatpush1.msra.mxu0 0.0
        %386 = vmatprep.subr.mxu0 0.0
        %387 = vmatpush1.msra.mxu0 0.0
        %388 = vmatprep.subr.mxu0 0.0
        %389 = vmatpush1.msra.mxu0 0.0
        %390 = vmatprep.subr.mxu0 0.0
        %391 = vmatpush1.msra.mxu0 0.0
        %392 = vmatprep.subr.mxu0 0.0
        %393 = vmatpush1.msra.mxu0 0.0
        %394 = vmatprep.subr.mxu0 0.0
        %395 = vmatpush1.msra.mxu0 0.0
        %396 = vmatprep.subr.mxu0 0.0
        %397 = vmatpush1.msra.mxu0 0.0
        %398 = vmatprep.subr.mxu0 0.0
        %399 = vmatpush1.msra.mxu0 0.0
        %400 = vmatprep.subr.mxu0 0.0
        %401 = vmatpush1.msra.mxu0 0.0
        %402 = vmatprep.subr.mxu0 0.0
        %403 = vmatpush1.msra.mxu0 0.0
        %404 = vmatprep.subr.mxu0 0.0
        %405 = vmatpush1.msra.mxu0 0.0
        %406 = vmatprep.subr.mxu0 0.0
        %407 = vmatpush1.msra.mxu0 0.0
        %408 = vmatprep.subr.mxu0 0.0
        %409 = vmatpush1.msra.mxu0 0.0
        %410 = vmatprep.subr.mxu0 0.0
        %411 = vmatpush1.msra.mxu0 0.0
        %412 = vmatprep.subr.mxu0 0.0
        %413 = vmatpush1.msra.mxu0 0.0
        %414 = vmatprep.subr.mxu0 0.0
        %415 = vmatpush1.msra.mxu0 0.0
        %416 = vmatprep.subr.mxu0 0.0
        %417 = vmatpush1.msra.mxu0 0.0
        %418 = vmatprep.subr.mxu0 0.0
        %419 = vmatpush1.msra.mxu0 0.0
        %420 = vmatprep.subr.mxu0 0.0
        %421 = vmatpush1.msra.mxu0 0.0
        %422 = vmatprep.subr.mxu0 0.0
        %423 = vmatpush1.msra.mxu0 0.0
        %424 = vmatprep.subr.mxu0 0.0
        %425 = vmatpush1.msra.mxu0 0.0
        %426 = vmatprep.subr.mxu0 0.0
        %427 = vmatpush1.msra.mxu0 0.0
        %428 = vmatprep.mubr.f32.mxu0 0.0
        %429 = vmatmul.mubr.f32.gmra.mrb[0].mxu0 %v341
        %v430 = vpop.f32.mrb[0].mxu0
        %v431 = vadd.f32 0.0, %v430
        %v432 = vpop.f32.mrb[0].mxu0
        %433 = vmatprep.mubr.f32.mxu0 0.0
        %434 = vmatmul.mubr.f32.gmra.mrb[0].mxu0 %v344
        %v435 = vpop.f32.mrb[0].mxu0
        %v436 = vadd.f32 0.0, %v435
        %v437 = vpop.f32.mrb[0].mxu0
        %438 = vmatprep.mubr.f32.mxu0 0.0
        %439 = vmatmul.mubr.f32.gmra.mrb[0].mxu0 %v347
        %v440 = vpop.f32.mrb[0].mxu0
        %v441 = vadd.f32 0.0, %v440
        %v442 = vpop.f32.mrb[0].mxu0
        %443 = vmatprep.mubr.f32.mxu0 0.0
        %444 = vmatmul.mubr.f32.gmra.mrb[0].mxu0 %v350
        %v445 = vpop.f32.mrb[0].mxu0
        %v446 = vadd.f32 0.0, %v445
        %v447 = vpop.f32.mrb[0].mxu0
        %448 = vmatprep.mubr.f32.mxu0 0.0
        %449 = vmatmul.mubr.f32.gmra.mrb[0].mxu0 %v353
        %v450 = vpop.f32.mrb[0].mxu0
        %v451 = vadd.f32 0.0, %v450
        %v452 = vpop.f32.mrb[0].mxu0
        %453 = vmatprep.mubr.f32.mxu0 0.0
        %454 = vmatmul.mubr.f32.gmra.mrb[0].mxu0 %v356
        %v455 = vpop.f32.mrb[0].mxu0
        %v456 = vadd.f32 0.0, %v455
        %v457 = vpop.f32.mrb[0].mxu0
        %458 = vmatprep.mubr.f32.mxu0 0.0
        %459 = vmatmul.mubr.f32.gmra.mrb[0].mxu0 %v359
        %v460 = vpop.f32.mrb[0].mxu0
        %v461 = vadd.f32 0.0, %v460
        %v462 = vpop.f32.mrb[0].mxu0
        %463 = vmatprep.mubr.f32.mxu0 0.0
        %464 = vmatmul.mubr.f32.gmra.mrb[0].mxu0 %v362
        %v465 = vpop.f32.mrb[0].mxu0
        %v466 = vadd.f32 0.0, %v465
        %v467 = vpop.f32.mrb[0].mxu0
        %468 = vdwg.mxu0
        %v469 = vmul.f32 %v311, %v431
        %v470 = vmul.f32 %v312, %v436
        %v471 = vmul.f32 %v313, %v441
        %v472 = vmul.f32 %v314, %v446
        %v473 = vmul.f32 %v315, %v451
        %v474 = vmul.f32 %v316, %v456
        %v475 = vmul.f32 %v317, %v461
        %v476 = vmul.f32 %v318, %v466
        %v478 = vsel %vm278, %v270, 0
        %v481 = vsel %vm278, %v271, 0
        %v484 = vsel %vm278, %v272, 0
        %v487 = vsel %vm278, %v273, 0
        %v490 = vsel %vm278, %v274, 0
        %v493 = vsel %vm278, %v275, 0
        %v496 = vsel %vm278, %v276, 0
        %v499 = vsel %vm278, %v277, 0
        %501 = vmatprep.subr.mxu0 0.0
        %502 = vmatpush1.msra.mxu0 %v469
        %503 = vmatprep.subr.mxu0 0.0
        %504 = vmatpush1.msra.mxu0 %v470
        %505 = vmatprep.subr.mxu0 0.0
        %506 = vmatpush1.msra.mxu0 %v471
        %507 = vmatprep.subr.mxu0 0.0
        %508 = vmatpush1.msra.mxu0 %v472
        %509 = vmatprep.subr.mxu0 0.0
        %510 = vmatpush1.msra.mxu0 %v473
        %511 = vmatprep.subr.mxu0 0.0
        %512 = vmatpush1.msra.mxu0 %v474
        %513 = vmatprep.subr.mxu0 0.0
        %514 = vmatpush1.msra.mxu0 %v475
        %515 = vmatprep.subr.mxu0 0.0
        %516 = vmatpush1.msra.mxu0 %v476
        %517 = vmatprep.subr.mxu0 0.0
        %518 = vmatpush1.msra.mxu0 0.0
        %519 = vmatprep.subr.mxu0 0.0
        %520 = vmatpush1.msra.mxu0 0.0
        %521 = vmatprep.subr.mxu0 0.0
        %522 = vmatpush1.msra.mxu0 0.0
        %523 = vmatprep.subr.mxu0 0.0
        %524 = vmatpush1.msra.mxu0 0.0
        %525 = vmatprep.subr.mxu0 0.0
        %526 = vmatpush1.msra.mxu0 0.0
        %527 = vmatprep.subr.mxu0 0.0
        %528 = vmatpush1.msra.mxu0 0.0
        %529 = vmatprep.subr.mxu0 0.0
        %530 = vmatpush1.msra.mxu0 0.0
        %531 = vmatprep.subr.mxu0 0.0
        %532 = vmatpush1.msra.mxu0 0.0
        %533 = vmatprep.subr.mxu0 0.0
        %534 = vmatpush1.msra.mxu0 0.0
        %535 = vmatprep.subr.mxu0 0.0
        %536 = vmatpush1.msra.mxu0 0.0
        %537 = vmatprep.subr.mxu0 0.0
        %538 = vmatpush1.msra.mxu0 0.0
        %539 = vmatprep.subr.mxu0 0.0
        %540 = vmatpush1.msra.mxu0 0.0
        %541 = vmatprep.subr.mxu0 0.0
        %542 = vmatpush1.msra.mxu0 0.0
        %543 = vmatprep.subr.mxu0 0.0
        %544 = vmatpush1.msra.mxu0 0.0
        %545 = vmatprep.subr.mxu0 0.0
        %546 = vmatpush1.msra.mxu0 0.0
        %547 = vmatprep.subr.mxu0 0.0
        %548 = vmatpush1.msra.mxu0 0.0
        %549 = vmatprep.subr.mxu0 0.0
        %550 = vmatpush1.msra.mxu0 0.0
        %551 = vmatprep.subr.mxu0 0.0
        %552 = vmatpush1.msra.mxu0 0.0
        %553 = vmatprep.subr.mxu0 0.0
        %554 = vmatpush1.msra.mxu0 0.0
        %555 = vmatprep.subr.mxu0 0.0
        %556 = vmatpush1.msra.mxu0 0.0
        %557 = vmatprep.subr.mxu0 0.0
        %558 = vmatpush1.msra.mxu0 0.0
        %559 = vmatprep.subr.mxu0 0.0
        %560 = vmatpush1.msra.mxu0 0.0
        %561 = vmatprep.subr.mxu0 0.0
        %562 = vmatpush1.msra.mxu0 0.0
        %563 = vmatprep.subr.mxu0 0.0
        %564 = vmatpush1.msra.mxu0 0.0
        %565 = vmatprep.mubr.f32.mxu0 0.0
        %566 = vmatmul.mubr.f32.gmra.mrb[0].mxu0 %v478
        %v567 = vpop.f32.mrb[0].mxu0
        %v568 = vadd.f32 0.0, %v567
        %v569 = vpop.f32.mrb[0].mxu0
        %570 = vmatprep.mubr.f32.mxu0 0.0
        %571 = vmatmul.mubr.f32.gmra.mrb[0].mxu0 %v481
        %v572 = vpop.f32.mrb[0].mxu0
        %v573 = vadd.f32 0.0, %v572
        %v574 = vpop.f32.mrb[0].mxu0
        %575 = vmatprep.mubr.f32.mxu0 0.0
        %576 = vmatmul.mubr.f32.gmra.mrb[0].mxu0 %v484
        %v577 = vpop.f32.mrb[0].mxu0
        %v578 = vadd.f32 0.0, %v577
        %v579 = vpop.f32.mrb[0].mxu0
        %580 = vmatprep.mubr.f32.mxu0 0.0
        %581 = vmatmul.mubr.f32.gmra.mrb[0].mxu0 %v487
        %v582 = vpop.f32.mrb[0].mxu0
        %v583 = vadd.f32 0.0, %v582
        %v584 = vpop.f32.mrb[0].mxu0
        %585 = vmatprep.mubr.f32.mxu0 0.0
        %586 = vmatmul.mubr.f32.gmra.mrb[0].mxu0 %v490
        %v587 = vpop.f32.mrb[0].mxu0
        %v588 = vadd.f32 0.0, %v587
        %v589 = vpop.f32.mrb[0].mxu0
        %590 = vmatprep.mubr.f32.mxu0 0.0
        %591 = vmatmul.mubr.f32.gmra.mrb[0].mxu0 %v493
        %v592 = vpop.f32.mrb[0].mxu0
        %v593 = vadd.f32 0.0, %v592
        %v594 = vpop.f32.mrb[0].mxu0
        %595 = vmatprep.mubr.f32.mxu0 0.0
        %596 = vmatmul.mubr.f32.gmra.mrb[0].mxu0 %v496
        %v597 = vpop.f32.mrb[0].mxu0
        %v598 = vadd.f32 0.0, %v597
        %v599 = vpop.f32.mrb[0].mxu0
        %600 = vmatprep.mubr.f32.mxu0 0.0
        %601 = vmatmul.mubr.f32.gmra.mrb[0].mxu0 %v499
        %v602 = vpop.f32.mrb[0].mxu0
        %v603 = vadd.f32 0.0, %v602
        %v604 = vpop.f32.mrb[0].mxu0
        %605 = vdwg.mxu0
        %v606 = vmul.f32 %v311, %v568
        %v607 = vmul.f32 %v312, %v573
        %v608 = vmul.f32 %v313, %v578
        %v609 = vmul.f32 %v314, %v583
        %v610 = vmul.f32 %v315, %v588
        %v611 = vmul.f32 %v316, %v593
        %v612 = vmul.f32 %v317, %v598
        %v613 = vmul.f32 %v318, %v603
        %v614 = vmul.f32 %v319, %v431
        %v615 = vmul.f32 %v320, %v436
        %v616 = vmul.f32 %v321, %v441
        %v617 = vmul.f32 %v322, %v446
        %v618 = vmul.f32 %v323, %v451
        %v619 = vmul.f32 %v324, %v456
        %v620 = vmul.f32 %v325, %v461
        %v621 = vmul.f32 %v326, %v466
        %v622 = vadd.f32 %v606, %v614
        %v623 = vadd.f32 %v607, %v615
        %v624 = vadd.f32 %v608, %v616
        %v625 = vadd.f32 %v609, %v617
        %v626 = vadd.f32 %v610, %v618
        %v627 = vadd.f32 %v611, %v619
        %v628 = vadd.f32 %v612, %v620
        %v629 = vadd.f32 %v613, %v621
        %v630 = vld [vmem:[%s3] sm:$0x1]
        %v632 = vlaneseq
        %v633 = vshrl.u32 %v632, 7
        %v634 = vsub.s32 0, %v633
        %v635 = vrot.slane %v630, %v634
        %v637 = vadd.f32 %v622, %v635
        %v638 = vadd.f32 %v623, %v635
        %v639 = vadd.f32 %v624, %v635
        %v640 = vadd.f32 %v625, %v635
        %v641 = vadd.f32 %v626, %v635
        %v642 = vadd.f32 %v627, %v635
        %v643 = vadd.f32 %v628, %v635
        %v644 = vadd.f32 %v629, %v635
        %v645 = vmax.f32 %v637, 0.0
        %v646 = vmax.f32 %v638, 0.0
        %v647 = vmax.f32 %v639, 0.0
        %v648 = vmax.f32 %v640, 0.0
        %v649 = vmax.f32 %v641, 0.0
        %v650 = vmax.f32 %v642, 0.0
        %v651 = vmax.f32 %v643, 0.0
        %v652 = vmax.f32 %v644, 0.0
        %v653 = vld [vmem:[%s4] sm:$0xff]
        %v654 = vld [vmem:[%s4 + $0x8] sm:$0xff]
        %vm655 = vcmask 130048
        %v657 = vsel %vm655, %v645, 0
        %v660 = vsel %vm655, %v646, 0
        %v663 = vsel %vm655, %v647, 0
        %v666 = vsel %vm655, %v648, 0
        %v669 = vsel %vm655, %v649, 0
        %v672 = vsel %vm655, %v650, 0
        %v675 = vsel %vm655, %v651, 0
        %v678 = vsel %vm655, %v652, 0
        %680 = vmatprep.subr.mxu0 0.0
        %681 = vmatpush1.msra.mxu0 %v653
        %682 = vmatprep.subr.mxu0 0.0
        %683 = vmatpush1.msra.mxu0 %v654
        %684 = vmatprep.subr.mxu0 0.0
        %685 = vmatpush1.msra.mxu0 0.0
        %686 = vmatprep.subr.mxu0 0.0
        %687 = vmatpush1.msra.mxu0 0.0
        %688 = vmatprep.subr.mxu0 0.0
        %689 = vmatpush1.msra.mxu0 0.0
        %690 = vmatprep.subr.mxu0 0.0
        %691 = vmatpush1.msra.mxu0 0.0
        %692 = vmatprep.subr.mxu0 0.0
        %693 = vmatpush1.msra.mxu0 0.0
        %694 = vmatprep.subr.mxu0 0.0
        %695 = vmatpush1.msra.mxu0 0.0
        %696 = vmatprep.subr.mxu0 0.0
        %697 = vmatpush1.msra.mxu0 0.0
        %698 = vmatprep.subr.mxu0 0.0
        %699 = vmatpush1.msra.mxu0 0.0
        %700 = vmatprep.subr.mxu0 0.0
        %701 = vmatpush1.msra.mxu0 0.0
        %702 = vmatprep.subr.mxu0 0.0
        %703 = vmatpush1.msra.mxu0 0.0
        %704 = vmatprep.subr.mxu0 0.0
        %705 = vmatpush1.msra.mxu0 0.0
        %706 = vmatprep.subr.mxu0 0.0
        %707 = vmatpush1.msra.mxu0 0.0
        %708 = vmatprep.subr.mxu0 0.0
        %709 = vmatpush1.msra.mxu0 0.0
        %710 = vmatprep.subr.mxu0 0.0
        %711 = vmatpush1.msra.mxu0 0.0
        %712 = vmatprep.subr.mxu0 0.0
        %713 = vmatpush1.msra.mxu0 0.0
        %714 = vmatprep.subr.mxu0 0.0
        %715 = vmatpush1.msra.mxu0 0.0
        %716 = vmatprep.subr.mxu0 0.0
        %717 = vmatpush1.msra.mxu0 0.0
        %718 = vmatprep.subr.mxu0 0.0
        %719 = vmatpush1.msra.mxu0 0.0
        %720 = vmatprep.subr.mxu0 0.0
        %721 = vmatpush1.msra.mxu0 0.0
        %722 = vmatprep.subr.mxu0 0.0
        %723 = vmatpush1.msra.mxu0 0.0
        %724 = vmatprep.subr.mxu0 0.0
        %725 = vmatpush1.msra.mxu0 0.0
        %726 = vmatprep.subr.mxu0 0.0
        %727 = vmatpush1.msra.mxu0 0.0
        %728 = vmatprep.subr.mxu0 0.0
        %729 = vmatpush1.msra.mxu0 0.0
        %730 = vmatprep.subr.mxu0 0.0
        %731 = vmatpush1.msra.mxu0 0.0
        %732 = vmatprep.subr.mxu0 0.0
        %733 = vmatpush1.msra.mxu0 0.0
        %734 = vmatprep.subr.mxu0 0.0
        %735 = vmatpush1.msra.mxu0 0.0
        %736 = vmatprep.subr.mxu0 0.0
        %737 = vmatpush1.msra.mxu0 0.0
        %738 = vmatprep.subr.mxu0 0.0
        %739 = vmatpush1.msra.mxu0 0.0
        %740 = vmatprep.subr.mxu0 0.0
        %741 = vmatpush1.msra.mxu0 0.0
        %742 = vmatprep.subr.mxu0 0.0
        %743 = vmatpush1.msra.mxu0 0.0
        %744 = vmatprep.mubr.f32.mxu0 0.0
        %745 = vmatmul.mubr.f32.gmra.mrb[0].mxu0 %v657
        %v746 = vpop.f32.mrb[0].mxu0
        %v747 = vadd.f32 0.0, %v746
        %v748 = vpop.f32.mrb[0].mxu0
        %749 = vmatprep.mubr.f32.mxu0 0.0
        %750 = vmatmul.mubr.f32.gmra.mrb[0].mxu0 %v660
        %v751 = vpop.f32.mrb[0].mxu0
        %v752 = vadd.f32 0.0, %v751
        %v753 = vpop.f32.mrb[0].mxu0
        %754 = vmatprep.mubr.f32.mxu0 0.0
        %755 = vmatmul.mubr.f32.gmra.mrb[0].mxu0 %v663
        %v756 = vpop.f32.mrb[0].mxu0
        %v757 = vadd.f32 0.0, %v756
        %v758 = vpop.f32.mrb[0].mxu0
        %759 = vmatprep.mubr.f32.mxu0 0.0
        %760 = vmatmul.mubr.f32.gmra.mrb[0].mxu0 %v666
        %v761 = vpop.f32.mrb[0].mxu0
        %v762 = vadd.f32 0.0, %v761
        %v763 = vpop.f32.mrb[0].mxu0
        %764 = vmatprep.mubr.f32.mxu0 0.0
        %765 = vmatmul.mubr.f32.gmra.mrb[0].mxu0 %v669
        %v766 = vpop.f32.mrb[0].mxu0
        %v767 = vadd.f32 0.0, %v766
        %v768 = vpop.f32.mrb[0].mxu0
        %769 = vmatprep.mubr.f32.mxu0 0.0
        %770 = vmatmul.mubr.f32.gmra.mrb[0].mxu0 %v672
        %v771 = vpop.f32.mrb[0].mxu0
        %v772 = vadd.f32 0.0, %v771
        %v773 = vpop.f32.mrb[0].mxu0
        %774 = vmatprep.mubr.f32.mxu0 0.0
        %775 = vmatmul.mubr.f32.gmra.mrb[0].mxu0 %v675
        %v776 = vpop.f32.mrb[0].mxu0
        %v777 = vadd.f32 0.0, %v776
        %v778 = vpop.f32.mrb[0].mxu0
        %779 = vmatprep.mubr.f32.mxu0 0.0
        %780 = vmatmul.mubr.f32.gmra.mrb[0].mxu0 %v678
        %v781 = vpop.f32.mrb[0].mxu0
        %v782 = vadd.f32 0.0, %v781
        %v783 = vpop.f32.mrb[0].mxu0
        %784 = vdwg.mxu0
        %v785 = vmul.f32 %v311, %v747
        %v786 = vmul.f32 %v312, %v752
        %v787 = vmul.f32 %v313, %v757
        %v788 = vmul.f32 %v314, %v762
        %v789 = vmul.f32 %v315, %v767
        %v790 = vmul.f32 %v316, %v772
        %v791 = vmul.f32 %v317, %v777
        %v792 = vmul.f32 %v318, %v782
        %793 = vmatprep.subr.mxu0 0.0
        %794 = vmatpush1.msra.mxu0 %v785
        %795 = vmatprep.subr.mxu0 0.0
        %796 = vmatpush1.msra.mxu0 %v786
        %797 = vmatprep.subr.mxu0 0.0
        %798 = vmatpush1.msra.mxu0 %v787
        %799 = vmatprep.subr.mxu0 0.0
        %800 = vmatpush1.msra.mxu0 %v788
        %801 = vmatprep.subr.mxu0 0.0
        %802 = vmatpush1.msra.mxu0 %v789
        %803 = vmatprep.subr.mxu0 0.0
        %804 = vmatpush1.msra.mxu0 %v790
        %805 = vmatprep.subr.mxu0 0.0
        %806 = vmatpush1.msra.mxu0 %v791
        %807 = vmatprep.subr.mxu0 0.0
        %808 = vmatpush1.msra.mxu0 %v792
        %809 = vmatprep.subr.mxu0 0.0
        %810 = vmatpush1.msra.mxu0 0.0
        %811 = vmatprep.subr.mxu0 0.0
        %812 = vmatpush1.msra.mxu0 0.0
        %813 = vmatprep.subr.mxu0 0.0
        %814 = vmatpush1.msra.mxu0 0.0
        %815 = vmatprep.subr.mxu0 0.0
        %816 = vmatpush1.msra.mxu0 0.0
        %817 = vmatprep.subr.mxu0 0.0
        %818 = vmatpush1.msra.mxu0 0.0
        %819 = vmatprep.subr.mxu0 0.0
        %820 = vmatpush1.msra.mxu0 0.0
        %821 = vmatprep.subr.mxu0 0.0
        %822 = vmatpush1.msra.mxu0 0.0
        %823 = vmatprep.subr.mxu0 0.0
        %824 = vmatpush1.msra.mxu0 0.0
        %825 = vmatprep.subr.mxu0 0.0
        %826 = vmatpush1.msra.mxu0 0.0
        %827 = vmatprep.subr.mxu0 0.0
        %828 = vmatpush1.msra.mxu0 0.0
        %829 = vmatprep.subr.mxu0 0.0
        %830 = vmatpush1.msra.mxu0 0.0
        %831 = vmatprep.subr.mxu0 0.0
        %832 = vmatpush1.msra.mxu0 0.0
        %833 = vmatprep.subr.mxu0 0.0
        %834 = vmatpush1.msra.mxu0 0.0
        %835 = vmatprep.subr.mxu0 0.0
        %836 = vmatpush1.msra.mxu0 0.0
        %837 = vmatprep.subr.mxu0 0.0
        %838 = vmatpush1.msra.mxu0 0.0
        %839 = vmatprep.subr.mxu0 0.0
        %840 = vmatpush1.msra.mxu0 0.0
        %841 = vmatprep.subr.mxu0 0.0
        %842 = vmatpush1.msra.mxu0 0.0
        %843 = vmatprep.subr.mxu0 0.0
        %844 = vmatpush1.msra.mxu0 0.0
        %845 = vmatprep.subr.mxu0 0.0
        %846 = vmatpush1.msra.mxu0 0.0
        %847 = vmatprep.subr.mxu0 0.0
        %848 = vmatpush1.msra.mxu0 0.0
        %849 = vmatprep.subr.mxu0 0.0
        %850 = vmatpush1.msra.mxu0 0.0
        %851 = vmatprep.subr.mxu0 0.0
        %852 = vmatpush1.msra.mxu0 0.0
        %853 = vmatprep.subr.mxu0 0.0
        %854 = vmatpush1.msra.mxu0 0.0
        %855 = vmatprep.subr.mxu0 0.0
        %856 = vmatpush1.msra.mxu0 0.0
        %857 = vmatprep.mubr.f32.mxu0 0.0
        %858 = vmatmul.mubr.f32.gmra.mrb[0].mxu0 %v478
        %v859 = vpop.f32.mrb[0].mxu0
        %v860 = vadd.f32 0.0, %v859
        %v861 = vpop.f32.mrb[0].mxu0
        %862 = vmatprep.mubr.f32.mxu0 0.0
        %863 = vmatmul.mubr.f32.gmra.mrb[0].mxu0 %v481
        %v864 = vpop.f32.mrb[0].mxu0
        %v865 = vadd.f32 0.0, %v864
        %v866 = vpop.f32.mrb[0].mxu0
        %867 = vmatprep.mubr.f32.mxu0 0.0
        %868 = vmatmul.mubr.f32.gmra.mrb[0].mxu0 %v484
        %v869 = vpop.f32.mrb[0].mxu0
        %v870 = vadd.f32 0.0, %v869
        %v871 = vpop.f32.mrb[0].mxu0
        %872 = vmatprep.mubr.f32.mxu0 0.0
        %873 = vmatmul.mubr.f32.gmra.mrb[0].mxu0 %v487
        %v874 = vpop.f32.mrb[0].mxu0
        %v875 = vadd.f32 0.0, %v874
        %v876 = vpop.f32.mrb[0].mxu0
        %877 = vmatprep.mubr.f32.mxu0 0.0
        %878 = vmatmul.mubr.f32.gmra.mrb[0].mxu0 %v490
        %v879 = vpop.f32.mrb[0].mxu0
        %v880 = vadd.f32 0.0, %v879
        %v881 = vpop.f32.mrb[0].mxu0
        %882 = vmatprep.mubr.f32.mxu0 0.0
        %883 = vmatmul.mubr.f32.gmra.mrb[0].mxu0 %v493
        %v884 = vpop.f32.mrb[0].mxu0
        %v885 = vadd.f32 0.0, %v884
        %v886 = vpop.f32.mrb[0].mxu0
        %887 = vmatprep.mubr.f32.mxu0 0.0
        %888 = vmatmul.mubr.f32.gmra.mrb[0].mxu0 %v496
        %v889 = vpop.f32.mrb[0].mxu0
        %v890 = vadd.f32 0.0, %v889
        %v891 = vpop.f32.mrb[0].mxu0
        %892 = vmatprep.mubr.f32.mxu0 0.0
        %893 = vmatmul.mubr.f32.gmra.mrb[0].mxu0 %v499
        %v894 = vpop.f32.mrb[0].mxu0
        %v895 = vadd.f32 0.0, %v894
        %v896 = vpop.f32.mrb[0].mxu0
        %897 = vdwg.mxu0
        %v898 = vmul.f32 %v311, %v860
        %v899 = vmul.f32 %v312, %v865
        %v900 = vmul.f32 %v313, %v870
        %v901 = vmul.f32 %v314, %v875
        %v902 = vmul.f32 %v315, %v880
        %v903 = vmul.f32 %v316, %v885
        %v904 = vmul.f32 %v317, %v890
        %v905 = vmul.f32 %v318, %v895
        %v906 = vmul.f32 %v319, %v747
        %v907 = vmul.f32 %v320, %v752
        %v908 = vmul.f32 %v321, %v757
        %v909 = vmul.f32 %v322, %v762
        %v910 = vmul.f32 %v323, %v767
        %v911 = vmul.f32 %v324, %v772
        %v912 = vmul.f32 %v325, %v777
        %v913 = vmul.f32 %v326, %v782
        %v914 = vadd.f32 %v898, %v906
        %v915 = vadd.f32 %v899, %v907
        %v916 = vadd.f32 %v900, %v908
        %v917 = vadd.f32 %v901, %v909
        %v918 = vadd.f32 %v902, %v910
        %v919 = vadd.f32 %v903, %v911
        %v920 = vadd.f32 %v904, %v912
        %v921 = vadd.f32 %v905, %v913
        %v922 = vld [vmem:[%s5] sm:$0x1]
        %v924 = vlaneseq
        %v925 = vshrl.u32 %v924, 7
        %v926 = vsub.s32 0, %v925
        %v927 = vrot.slane %v922, %v926
        %v929 = vadd.f32 %v914, %v927
        %v930 = vadd.f32 %v915, %v927
        %v931 = vadd.f32 %v916, %v927
        %v932 = vadd.f32 %v917, %v927
        %v933 = vadd.f32 %v918, %v927
        %v934 = vadd.f32 %v919, %v927
        %v935 = vadd.f32 %v920, %v927
        %v936 = vadd.f32 %v921, %v927
        %937 = vmax.xlane.f32.xlu0 %v929
        %v938 = vpop.xlane.xlu0 %937
        %939 = vmax.xlane.f32.xlu0 %v930
        %v940 = vpop.xlane.xlu0 %939
        %941 = vmax.xlane.f32.xlu0 %v931
        %v942 = vpop.xlane.xlu0 %941
        %943 = vmax.xlane.f32.xlu0 %v932
        %v944 = vpop.xlane.xlu0 %943
        %945 = vmax.xlane.f32.xlu0 %v933
        %v946 = vpop.xlane.xlu0 %945
        %947 = vmax.xlane.f32.xlu0 %v934
        %v948 = vpop.xlane.xlu0 %947
        %949 = vmax.xlane.f32.xlu0 %v935
        %v950 = vpop.xlane.xlu0 %949
        %951 = vmax.xlane.f32.xlu0 %v936
        %v952 = vpop.xlane.xlu0 %951
        %v953 = vsub.f32 %v929, %v938
        %v954 = vsub.f32 %v930, %v940
        %v955 = vsub.f32 %v931, %v942
        %v956 = vsub.f32 %v932, %v944
        %v957 = vsub.f32 %v933, %v946
        %v958 = vsub.f32 %v934, %v948
        %v959 = vsub.f32 %v935, %v950
        %v960 = vsub.f32 %v936, %v952
        %v961 = vmul.f32 %v953, 1.442695
        %v962 = vpow.pop %v961
        %v963 = vmul.f32 %v954, 1.442695
        %v964 = vpow.pop %v963
        %v965 = vmul.f32 %v955, 1.442695
        %v966 = vpow.pop %v965
        %v967 = vmul.f32 %v956, 1.442695
        %v968 = vpow.pop %v967
        %v969 = vmul.f32 %v957, 1.442695
        %v970 = vpow.pop %v969
        %v971 = vmul.f32 %v958, 1.442695
        %v972 = vpow.pop %v971
        %v973 = vmul.f32 %v959, 1.442695
        %v974 = vpow.pop %v973
        %v975 = vmul.f32 %v960, 1.442695
        %v976 = vpow.pop %v975
        %977 = vadd.xlane.f32.xlu0 %v962
        %v978 = vpop.xlane.xlu0 %977
        %979 = vadd.xlane.f32.xlu0 %v964
        %v980 = vpop.xlane.xlu0 %979
        %981 = vadd.xlane.f32.xlu0 %v966
        %v982 = vpop.xlane.xlu0 %981
        %983 = vadd.xlane.f32.xlu0 %v968
        %v984 = vpop.xlane.xlu0 %983
        %985 = vadd.xlane.f32.xlu0 %v970
        %v986 = vpop.xlane.xlu0 %985
        %987 = vadd.xlane.f32.xlu0 %v972
        %v988 = vpop.xlane.xlu0 %987
        %989 = vadd.xlane.f32.xlu0 %v974
        %v990 = vpop.xlane.xlu0 %989
        %991 = vadd.xlane.f32.xlu0 %v976
        %v992 = vpop.xlane.xlu0 %991
        %v993 = vlog2.pop %v978
        %v994 = vmul.f32 %v993, 0.6931472
        %v995 = vlog2.pop %v980
        %v996 = vmul.f32 %v995, 0.6931472
        %v997 = vlog2.pop %v982
        %v998 = vmul.f32 %v997, 0.6931472
        %v999 = vlog2.pop %v984
        %v1000 = vmul.f32 %v999, 0.6931472
        %v1001 = vlog2.pop %v986
        %v1002 = vmul.f32 %v1001, 0.6931472
        %v1003 = vlog2.pop %v988
        %v1004 = vmul.f32 %v1003, 0.6931472
        %v1005 = vlog2.pop %v990
        %v1006 = vmul.f32 %v1005, 0.6931472
        %v1007 = vlog2.pop %v992
        %v1008 = vmul.f32 %v1007, 0.6931472
        %v1009 = vsub.f32 %v953, %v994
        %v1010 = vsub.f32 %v954, %v996
        %v1011 = vsub.f32 %v955, %v998
        %v1012 = vsub.f32 %v956, %v1000
        %v1013 = vsub.f32 %v957, %v1002
        %v1014 = vsub.f32 %v958, %v1004
        %v1015 = vsub.f32 %v959, %v1006
        %v1016 = vsub.f32 %v960, %v1008
        %1017 = vst [vmem:[%s259] sm:$0xff] %v1009
        %1018 = vst [vmem:[%s259 + $0x8] sm:$0xff] %v1010
        %1019 = vst [vmem:[%s259 + $0x10] sm:$0xff] %v1011
        %1020 = vst [vmem:[%s259 + $0x18] sm:$0xff] %v1012
        %1021 = vst [vmem:[%s259 + $0x20] sm:$0xff] %v1013
        %1022 = vst [vmem:[%s259 + $0x28] sm:$0xff] %v1014
        %1023 = vst [vmem:[%s259 + $0x30] sm:$0xff] %v1015
        %1024 = vst [vmem:[%s259 + $0x38] sm:$0xff] %v1016
        %s1025 = sand.u32 %s164, 1
        %s1026 = scalar_lea.sflag [#allocation3], %s1025
        %s1027 = sand.u32 %s164, 1
        %s1028 = smul.addr %s1027, 64
        %s1029 = scalar_lea.vmem [#allocation2], %s1028
        // Predicated region
        $region45: #{tpu_custom_call.1} parent=43 // pred_check
          %p1030 = pneg %p174
        $region46: #{tpu_custom_call.1} parent=43 // pred_check_branch
          %1032 = sbr.rel (%p1030) target = $region48
        $region47: #{tpu_custom_call.1} parent=43 // pred_region
          %s1034 = ssub.s32 1024, 1024
          %1035 = vsyncadd %s1026, %s1034
          %s1036 = smul.addr %s20, 8
          %s1037 = smul.addr %s1036, 128
          %s1038 = scalar_lea.hbm %s6, %s1037
          %s1039 = sshll.u32 %s1029, 4
          %s1040 = int_to_ptr.vmem [resolvable:$true] %s1039
          %1045 = dma.vmem_to_hbm [thread:$0]  %s1040, 1024, %s1038, %s1026, 128, 128, 8
        $region48: #{tpu_custom_call.1} parent=43 // pred_fallthru
          _
      $region44: #{tpu_custom_call.1} parent=5 // pred_fallthru
        _
      %p1046 = scmp.le.s32.totalorder 2, %s15
      // Predicated region
      $region49: #{tpu_custom_call.1} parent=5 // pred_check
        %p1047 = pneg %p1046
      $region50: #{tpu_custom_call.1} parent=5 // pred_check_branch
        %1049 = sbr.rel (%p1047) target = $region52
      $region51: #{tpu_custom_call.1} parent=5 // pred_region
        %s1050 = ssub.s32 %s15, 2
        // Predicated region
        $region53: #{tpu_custom_call.1} parent=51 // pred_check
          %p1051 = pneg %p180
        $region54: #{tpu_custom_call.1} parent=51 // pred_check_branch
          %1053 = sbr.rel (%p1051) target = $region56
        $region55: #{tpu_custom_call.1} parent=51 // pred_region
          %s1054 = sand.u32 %s165, 1
          %s1055 = scalar_lea.sflag [#allocation3], %s1054
          %s1056 = sand.u32 %s165, 1
          %s1057 = smul.addr %s1056, 64
          %s1058 = scalar_lea.vmem [#allocation2], %s1057
          %1059 = dma.done %s1055, 1024
        $region56: #{tpu_custom_call.1} parent=51 // pred_fallthru
          _
      $region52: #{tpu_custom_call.1} parent=5 // pred_fallthru
        _
    $region6: #{tpu_custom_call.1} parent=1 // loop_footer
      %s19 = sadd.s32 1, %s15
    $region7: #{tpu_custom_call.1} parent=1 // loop_footer_branch
      %14 = sbr.rel target = $region3
    $region8: #{tpu_custom_call.1} parent=1 // loop_exit
      _
    %1060 = vsyncpa [#allocation3], 1
    %s1061 = scalar_lea.sflag [#allocation3], 1
    %1062 = vsyncpa %s1061, 1

</llo_original>
